<compile_context>
chip_gen: v7x
topology: tpu7x:2x2x1
jax: 0.10.0
libtpu: 0.0.40
codegen_flags: <defaults>
</compile_context>

<pallas_src>
import functools

import jax
import jax.numpy as jnp
from jax.experimental import pallas as pl
from jax.experimental.pallas import tpu as pltpu


def _round_up(x: int, m: int) -> int:
    return (x + m - 1) // m * m


def cnn_kernel(p_ref, w_ref, b_ref, o_ref):
    """One im2col matmul + tap-max + bias + ReLU for a batch block.

    p_ref: (L, bb, K) bf16   im2col patches (tap-major; bb is a multiple of 16)
    w_ref: (K, Fp)    bf16   flattened conv weight (resident across grid)
    b_ref: (1, Fp)    f32
    o_ref: (bb, Fp)   f32
    """
    L, bb, K = p_ref.shape
    # Collapse (L, bb) -> L*bb rows; bb is a multiple of 16 so this is
    # sublane-tile aligned for bf16 (no relayout).
    p2 = p_ref[...].reshape(L * bb, K)

    # Single MXU pass over all taps & batch rows, f32 accumulation.
    conv = jnp.dot(p2, w_ref[...], preferred_element_type=jnp.float32)  # (L*bb, Fp)

    # Max-pool over taps: rows [t*bb, (t+1)*bb) belong to tap t (aligned slices).
    pooled = conv[0:bb]
    for t in range(1, L):
        pooled = jnp.maximum(pooled, conv[t * bb:(t + 1) * bb])

    # bias + ReLU hoisted past the max: max_t relu(c_t + b) == relu(max_t c_t + b).
    o_ref[...] = jnp.maximum(pooled + b_ref[...], 0.0)


@functools.partial(jax.jit, static_argnames=("block_b",))
def cnn_forward(x_ncl, weight, bias, *, block_b=256):
    """x_ncl: (B, E, M) as PyTorch Conv1d input; weight: (F, E, W); bias: (F,)."""
    B, E, M = x_ncl.shape
    F_out, _, W = weight.shape
    L = M - W + 1          # conv output length == maxpool kernel size
    K = W * E              # im2col contraction size

    # ---- batch tiling (bb multiple of 16 for bf16 sublane alignment) ----
    bb = _round_up(min(block_b, _round_up(B, 16)), 16)
    B_pad = _round_up(B, bb)

    # ---- im2col built directly from the (B, E, M) layout ----
    # patches[t, b, e*W + w] = x[b, e, t + w]
    idx = jnp.arange(L)[:, None] + jnp.arange(W)[None, :]          # (L, W)
    patches = x_ncl[:, :, idx]                                     # (B, E, L, W)
    patches = jnp.transpose(patches, (2, 0, 1, 3)).reshape(L, B, K)
    if B_pad != B:
        patches = jnp.pad(patches, ((0, 0), (0, B_pad - B), (0, 0)))
    patches = patches.astype(jnp.bfloat16)

    # ---- weight/bias: (F, E, W) -> (K, Fp), lane-dense output width ----
    # TODO(synk): in a real model, fold this weight transform into a one-time constant.
    Fp = _round_up(F_out, 128)
    w2 = jnp.transpose(weight.reshape(F_out, K), (1, 0))           # (K, F)
    w2 = jnp.pad(w2, ((0, 0), (0, Fp - F_out))).astype(jnp.bfloat16)
    b2 = jnp.pad(bias.astype(jnp.float32), (0, Fp - F_out)).reshape(1, Fp)

    out = pl.pallas_call(
        cnn_kernel,
        out_shape=jax.ShapeDtypeStruct((B_pad, Fp), jnp.float32),
        grid=(B_pad // bb,),
        in_specs=[
            pl.BlockSpec((L, bb, K), lambda i: (0, i, 0)),   # batch-tiled patches
            pl.BlockSpec((K, Fp), lambda i: (0, 0)),          # weight resident
            pl.BlockSpec((1, Fp), lambda i: (0, 0)),          # bias resident
        ],
        out_specs=pl.BlockSpec((bb, Fp), lambda i: (i, 0)),
        compiler_params=pltpu.CompilerParams(
            dimension_semantics=("parallel",)),
    )(patches, w2, b2)

    return out[:B, :F_out]


def reference(x_ncl, weight, bias):
    """Plain-JAX reference of the PyTorch forward (conv1d -> relu -> maxpool -> squeeze)."""
    B, E, M = x_ncl.shape
    F_out, _, W = weight.shape
    L = M - W + 1
    cols = []
    for t in range(L):
        patch = x_ncl[:, :, t:t + W]                       # (B, E, W)
        conv = jnp.einsum("bew,few->bf", patch, weight) + bias
        cols.append(jnp.maximum(conv, 0.0))
    return jnp.max(jnp.stack(cols, axis=-1), axis=-1)      # (B, F)


if __name__ == "__main__":
    # Small shapes consistent with the module: CNN(embed_size=32, m_word=21,
    # window_size=5, filters_num=64); batch = (#words flattened) = 8.
    embed_size = 32
    m_word = 21
    window_size = 5
    filters_num = 64
    batch = 8

    key = jax.random.PRNGKey(0)
    kx, kw, kb = jax.random.split(key, 3)

    # Deterministic PyTorch-style init: U(-1/sqrt(fan_in), 1/sqrt(fan_in)).
    fan_in = embed_size * window_size
    bound = 1.0 / (fan_in ** 0.5)
    weight = jax.random.uniform(
        kw, (filters_num, embed_size, window_size), jnp.float32, -bound, bound)
    bias = jax.random.uniform(kb, (filters_num,), jnp.float32, -bound, bound)

    x = jax.random.normal(kx, (batch, embed_size, m_word), jnp.float32)

    out = cnn_forward(x, weight, bias)
    out = jax.block_until_ready(out)

    ref = reference(x, weight, bias)
    assert out.shape == (batch, filters_num), out.shape
    # bf16 matmul inputs with f32 accumulation -> relaxed tolerance vs f32 reference.
    assert jnp.allclose(out, ref, atol=2e-2, rtol=2e-2), float(
        jnp.max(jnp.abs(out - ref)))

    print("KERNEL_OK")
</pallas_src>

<mosaic_0001>
module attributes {stable_mosaic.version = 11 : i64} {
  func.func @cnn_kernel(%arg0: i32, %arg1: memref<17x16x160xbf16, #tpu.memory_space<vmem>>, %arg2: memref<160x128xbf16, #tpu.memory_space<vmem>>, %arg3: memref<1x128xf32, #tpu.memory_space<vmem>>, %arg4: memref<16x128xf32, #tpu.memory_space<vmem>>) attributes {dimension_semantics = [#tpu.dimension_semantics<parallel>], iteration_bounds = array<i64: 1>, scalar_prefetch = 0 : i64, scratch_operands = 0 : i64, tpu.core_type = #tpu.core_type<tc>, window_params = [{transform_indices = @transform_0, window_bounds = array<i64: 17, 16, 160>}, {pipeline_mode = #tpu.pipeline_mode<synchronous>, transform_indices = @transform_1, window_bounds = array<i64: 160, 128>}, {pipeline_mode = #tpu.pipeline_mode<synchronous>, transform_indices = @transform_2, window_bounds = array<i64: 1, 128>}, {transform_indices = @transform_3, window_bounds = array<i64: 16, 128>}]} {
    %c0 = arith.constant 0 : index
    %c0_0 = arith.constant 0 : index
    %c0_1 = arith.constant 0 : index
    %0 = vector.load %arg1[%c0, %c0_0, %c0_1] : memref<17x16x160xbf16, #tpu.memory_space<vmem>>, vector<17x16x160xbf16>
    %1 = vector.shape_cast %0 : vector<17x16x160xbf16> to vector<272x160xbf16>
    %c0_2 = arith.constant 0 : index
    %c0_3 = arith.constant 0 : index
    %2 = vector.load %arg2[%c0_2, %c0_3] : memref<160x128xbf16, #tpu.memory_space<vmem>>, vector<160x128xbf16>
    %cst = arith.constant dense<0.000000e+00> : vector<272x128xf32>
    %3 = tpu.matmul %1, %2, %cst {dimension_numbers = #tpu.dot_dimension_numbers<[1], [0], [0], [1], [0, 0, 1, 1], [], []>} : vector<272x160xbf16>, vector<160x128xbf16>, vector<272x128xf32> -> vector<272x128xf32>
    %4 = vector.extract_strided_slice %3 {offsets = [0, 0], sizes = [16, 128], strides = [1, 1]} : vector<272x128xf32> to vector<16x128xf32>
    %5 = vector.extract_strided_slice %3 {offsets = [16, 0], sizes = [16, 128], strides = [1, 1]} : vector<272x128xf32> to vector<16x128xf32>
    %6 = arith.maximumf %4, %5 : vector<16x128xf32>
    %7 = vector.extract_strided_slice %3 {offsets = [32, 0], sizes = [16, 128], strides = [1, 1]} : vector<272x128xf32> to vector<16x128xf32>
    %8 = arith.maximumf %6, %7 : vector<16x128xf32>
    %9 = vector.extract_strided_slice %3 {offsets = [48, 0], sizes = [16, 128], strides = [1, 1]} : vector<272x128xf32> to vector<16x128xf32>
    %10 = arith.maximumf %8, %9 : vector<16x128xf32>
    %11 = vector.extract_strided_slice %3 {offsets = [64, 0], sizes = [16, 128], strides = [1, 1]} : vector<272x128xf32> to vector<16x128xf32>
    %12 = arith.maximumf %10, %11 : vector<16x128xf32>
    %13 = vector.extract_strided_slice %3 {offsets = [80, 0], sizes = [16, 128], strides = [1, 1]} : vector<272x128xf32> to vector<16x128xf32>
    %14 = arith.maximumf %12, %13 : vector<16x128xf32>
    %15 = vector.extract_strided_slice %3 {offsets = [96, 0], sizes = [16, 128], strides = [1, 1]} : vector<272x128xf32> to vector<16x128xf32>
    %16 = arith.maximumf %14, %15 : vector<16x128xf32>
    %17 = vector.extract_strided_slice %3 {offsets = [112, 0], sizes = [16, 128], strides = [1, 1]} : vector<272x128xf32> to vector<16x128xf32>
    %18 = arith.maximumf %16, %17 : vector<16x128xf32>
    %19 = vector.extract_strided_slice %3 {offsets = [128, 0], sizes = [16, 128], strides = [1, 1]} : vector<272x128xf32> to vector<16x128xf32>
    %20 = arith.maximumf %18, %19 : vector<16x128xf32>
    %21 = vector.extract_strided_slice %3 {offsets = [144, 0], sizes = [16, 128], strides = [1, 1]} : vector<272x128xf32> to vector<16x128xf32>
    %22 = arith.maximumf %20, %21 : vector<16x128xf32>
    %23 = vector.extract_strided_slice %3 {offsets = [160, 0], sizes = [16, 128], strides = [1, 1]} : vector<272x128xf32> to vector<16x128xf32>
    %24 = arith.maximumf %22, %23 : vector<16x128xf32>
    %25 = vector.extract_strided_slice %3 {offsets = [176, 0], sizes = [16, 128], strides = [1, 1]} : vector<272x128xf32> to vector<16x128xf32>
    %26 = arith.maximumf %24, %25 : vector<16x128xf32>
    %27 = vector.extract_strided_slice %3 {offsets = [192, 0], sizes = [16, 128], strides = [1, 1]} : vector<272x128xf32> to vector<16x128xf32>
    %28 = arith.maximumf %26, %27 : vector<16x128xf32>
    %29 = vector.extract_strided_slice %3 {offsets = [208, 0], sizes = [16, 128], strides = [1, 1]} : vector<272x128xf32> to vector<16x128xf32>
    %30 = arith.maximumf %28, %29 : vector<16x128xf32>
    %31 = vector.extract_strided_slice %3 {offsets = [224, 0], sizes = [16, 128], strides = [1, 1]} : vector<272x128xf32> to vector<16x128xf32>
    %32 = arith.maximumf %30, %31 : vector<16x128xf32>
    %33 = vector.extract_strided_slice %3 {offsets = [240, 0], sizes = [16, 128], strides = [1, 1]} : vector<272x128xf32> to vector<16x128xf32>
    %34 = arith.maximumf %32, %33 : vector<16x128xf32>
    %35 = vector.extract_strided_slice %3 {offsets = [256, 0], sizes = [16, 128], strides = [1, 1]} : vector<272x128xf32> to vector<16x128xf32>
    %36 = arith.maximumf %34, %35 : vector<16x128xf32>
    %c0_4 = arith.constant 0 : index
    %c0_5 = arith.constant 0 : index
    %37 = vector.load %arg3[%c0_4, %c0_5] : memref<1x128xf32, #tpu.memory_space<vmem>>, vector<1x128xf32>
    %38 = vector.broadcast %37 : vector<1x128xf32> to vector<16x128xf32>
    %39 = arith.addf %36, %38 : vector<16x128xf32>
    %cst_6 = arith.constant 0.000000e+00 : f32
    %40 = vector.broadcast %cst_6 : f32 to vector<16x128xf32>
    %41 = arith.maximumf %39, %40 : vector<16x128xf32>
    %c0_7 = arith.constant 0 : index
    %c0_8 = arith.constant 0 : index
    %42 = vector.load %arg4[%c0_7, %c0_8] : memref<16x128xf32, #tpu.memory_space<vmem>>, vector<16x128xf32>
    tpu.vector_store %arg4[%c0_7, %c0_8], %41 {strides = array<i32>} : memref<16x128xf32, #tpu.memory_space<vmem>>, vector<16x128xf32>,
    return
  }
  func.func @transform_0(%arg0: i32) -> (i32, i32, i32) {
    %c0_i32 = arith.constant 0 : i32
    %c0_i32_0 = arith.constant 0 : i32
    %c0_i32_1 = arith.constant 0 : i32
    return %c0_i32, %arg0, %c0_i32_0 : i32, i32, i32
  }
  func.func @transform_1(%arg0: i32) -> (i32, i32) {
    %c0_i32 = arith.constant 0 : i32
    %c0_i32_0 = arith.constant 0 : i32
    %c0_i32_1 = arith.constant 0 : i32
    return %c0_i32, %c0_i32_0 : i32, i32
  }
  func.func @transform_2(%arg0: i32) -> (i32, i32) {
    %c0_i32 = arith.constant 0 : i32
    %c0_i32_0 = arith.constant 0 : i32
    %c0_i32_1 = arith.constant 0 : i32
    return %c0_i32, %c0_i32_0 : i32, i32
  }
  func.func @transform_3(%arg0: i32) -> (i32, i32) {
    %c0_i32 = arith.constant 0 : i32
    %c0_i32_0 = arith.constant 0 : i32
    return %arg0, %c0_i32 : i32, i32
  }
}

</mosaic_0001>

<llo_original>
// kernel: cnn_forward.1
$region0: #{cnn_forward.1}
  #allocation0 [shape = 'u32[]', space=smem, size = 0x4, offset = 0x4, fixed_abs, tag = 'smem constant byte address 0x4 - core index']
  #allocation1 [shape = 'u32[144,128]{1,0:T(1,128)}', space=vmem, size = 0x12000, scoped, tag = 'internal scratch']
  %s0 = inlined_call_operand.vmem [shape: bf16[17,16,160], index: 0, kind: input, shape index: {}]
  %s1 = inlined_call_operand.vmem [shape: bf16[160,128], index: 1, kind: input, shape index: {}]
  %s2 = inlined_call_operand.vmem [shape: f32[1,128], index: 2, kind: input, shape index: {}]
  %s3 = inlined_call_operand.vmem [shape: f32[16,128], index: 3, kind: output, shape index: {}]
  %s4 = sld [smem:[#allocation0]]
  $region22: #{cnn_forward.1} parent=0
    _
  %s6 = ssub.s32 1, %s4
  %s7 = scalar_select 0, %s6, %s4
  // Predicated region
  $region2: #{cnn_forward.1} parent=0 // pred_check
    _
  $region3: #{cnn_forward.1} parent=0 // pred_check_branch
    %9 = sbr.rel (0) target = $region5
  $region4: #{cnn_forward.1} parent=0 // pred_region
    _
  $region5: #{cnn_forward.1} parent=0 // pred_fallthru
    _
  // Predicated region
  $region6: #{cnn_forward.1} parent=0 // pred_check
    _
  $region7: #{cnn_forward.1} parent=0 // pred_check_branch
    %11 = sbr.rel (0) target = $region9
  $region8: #{cnn_forward.1} parent=0 // pred_region
    _
  $region9: #{cnn_forward.1} parent=0 // pred_fallthru
    _
  // Predicated region
  $region10: #{cnn_forward.1} parent=0 // pred_check
    _
  $region11: #{cnn_forward.1} parent=0 // pred_check_branch
    %13 = sbr.rel (0) target = $region13
  $region12: #{cnn_forward.1} parent=0 // pred_region
    _
  $region13: #{cnn_forward.1} parent=0 // pred_fallthru
    _
  %v15 = vld [vmem:[%s0] sm:$0xff]
  %v16 = vld [vmem:[%s0 + $0x8] sm:$0xff]
  %v17 = vld [vmem:[%s0 + $0x10] sm:$0xff]
  %v18 = vld [vmem:[%s0 + $0x18] sm:$0xff]
  %v19 = vld [vmem:[%s0 + $0x20] sm:$0xff]
  %v20 = vld [vmem:[%s0 + $0x28] sm:$0xff]
  %v21 = vld [vmem:[%s0 + $0x30] sm:$0xff]
  %v22 = vld [vmem:[%s0 + $0x38] sm:$0xff]
  %v23 = vld [vmem:[%s0 + $0x40] sm:$0xff]
  %v24 = vld [vmem:[%s0 + $0x48] sm:$0xff]
  %v25 = vld [vmem:[%s0 + $0x50] sm:$0xff]
  %v26 = vld [vmem:[%s0 + $0x58] sm:$0xff]
  %v27 = vld [vmem:[%s0 + $0x60] sm:$0xff]
  %v28 = vld [vmem:[%s0 + $0x68] sm:$0xff]
  %v29 = vld [vmem:[%s0 + $0x70] sm:$0xff]
  %v30 = vld [vmem:[%s0 + $0x78] sm:$0xff]
  %v31 = vld [vmem:[%s0 + $0x80] sm:$0xff]
  %v32 = vld [vmem:[%s0 + $0x88] sm:$0xff]
  %v33 = vld [vmem:[%s0 + $0x90] sm:$0xff]
  %v34 = vld [vmem:[%s0 + $0x98] sm:$0xff]
  %v35 = vld [vmem:[%s0 + $0xa0] sm:$0xff]
  %v36 = vld [vmem:[%s0 + $0xa8] sm:$0xff]
  %v37 = vld [vmem:[%s0 + $0xb0] sm:$0xff]
  %v38 = vld [vmem:[%s0 + $0xb8] sm:$0xff]
  %v39 = vld [vmem:[%s0 + $0xc0] sm:$0xff]
  %v40 = vld [vmem:[%s0 + $0xc8] sm:$0xff]
  %v41 = vld [vmem:[%s0 + $0xd0] sm:$0xff]
  %v42 = vld [vmem:[%s0 + $0xd8] sm:$0xff]
  %v43 = vld [vmem:[%s0 + $0xe0] sm:$0xff]
  %v44 = vld [vmem:[%s0 + $0xe8] sm:$0xff]
  %v45 = vld [vmem:[%s0 + $0xf0] sm:$0xff]
  %v46 = vld [vmem:[%s0 + $0xf8] sm:$0xff]
  %v47 = vld [vmem:[%s0 + $0x100] sm:$0xff]
  %v48 = vld [vmem:[%s0 + $0x108] sm:$0xff]
  %v49 = vld [vmem:[%s1] sm:$0xf]
  %v50 = vld [vmem:[%s1 + $0x4] sm:$0xf]
  %v51 = vld [vmem:[%s1 + $0x8] sm:$0xf]
  %v52 = vld [vmem:[%s1 + $0xc] sm:$0xf]
  %v53 = vld [vmem:[%s1 + $0x10] sm:$0xf]
  %v54 = vld [vmem:[%s1 + $0x14] sm:$0xf]
  %v55 = vld [vmem:[%s1 + $0x18] sm:$0xf]
  %v56 = vld [vmem:[%s1 + $0x1c] sm:$0xf]
  %v57 = vld [vmem:[%s1 + $0x20] sm:$0xf]
  %v58 = vld [vmem:[%s1 + $0x24] sm:$0xf]
  %v59 = vld [vmem:[%s1 + $0x28] sm:$0xf]
  %v60 = vld [vmem:[%s1 + $0x2c] sm:$0xf]
  %v61 = vld [vmem:[%s1 + $0x30] sm:$0xf]
  %v62 = vld [vmem:[%s1 + $0x34] sm:$0xf]
  %v63 = vld [vmem:[%s1 + $0x38] sm:$0xf]
  %v64 = vld [vmem:[%s1 + $0x3c] sm:$0xf]
  %v65 = vld [vmem:[%s1 + $0x40] sm:$0xf]
  %v66 = vld [vmem:[%s1 + $0x44] sm:$0xf]
  %v67 = vld [vmem:[%s1 + $0x48] sm:$0xf]
  %v68 = vld [vmem:[%s1 + $0x4c] sm:$0xf]
  %v103 = vunpack.c.l.b16 %v15
  %v104 = vunpack.c.h.b16 %v15
  %v105 = vunpack.c.l.b16 %v16
  %v106 = vunpack.c.h.b16 %v16
  %v107 = vunpack.c.l.b16 %v17
  %v108 = vunpack.c.h.b16 %v17
  %v109 = vunpack.c.l.b16 %v18
  %v110 = vunpack.c.h.b16 %v18
  %v111 = vunpack.c.l.b16 %v19
  %v112 = vunpack.c.h.b16 %v19
  %v113 = vunpack.c.l.b16 %v20
  %v114 = vunpack.c.h.b16 %v20
  %v115 = vunpack.c.l.b16 %v21
  %v116 = vunpack.c.h.b16 %v21
  %v117 = vunpack.c.l.b16 %v22
  %v118 = vunpack.c.h.b16 %v22
  %v119 = vunpack.c.l.b16 %v23
  %v120 = vunpack.c.h.b16 %v23
  %v121 = vunpack.c.l.b16 %v24
  %v122 = vunpack.c.h.b16 %v24
  %v123 = vunpack.c.l.b16 %v25
  %v124 = vunpack.c.h.b16 %v25
  %v125 = vunpack.c.l.b16 %v26
  %v126 = vunpack.c.h.b16 %v26
  %v127 = vunpack.c.l.b16 %v27
  %v128 = vunpack.c.h.b16 %v27
  %v129 = vunpack.c.l.b16 %v28
  %v130 = vunpack.c.h.b16 %v28
  %v131 = vunpack.c.l.b16 %v29
  %v132 = vunpack.c.h.b16 %v29
  %v133 = vunpack.c.l.b16 %v30
  %v134 = vunpack.c.h.b16 %v30
  %v135 = vunpack.c.l.b16 %v31
  %v136 = vunpack.c.h.b16 %v31
  %v137 = vunpack.c.l.b16 %v32
  %v138 = vunpack.c.h.b16 %v32
  %v139 = vunpack.c.l.b16 %v33
  %v140 = vunpack.c.h.b16 %v33
  %v141 = vunpack.c.l.b16 %v34
  %v142 = vunpack.c.h.b16 %v34
  %v143 = vunpack.c.l.b16 %v35
  %v144 = vunpack.c.h.b16 %v35
  %v145 = vunpack.c.l.b16 %v36
  %v146 = vunpack.c.h.b16 %v36
  %v147 = vunpack.c.l.b16 %v37
  %v148 = vunpack.c.h.b16 %v37
  %v149 = vunpack.c.l.b16 %v38
  %v150 = vunpack.c.h.b16 %v38
  %v151 = vunpack.c.l.b16 %v39
  %v152 = vunpack.c.h.b16 %v39
  %v153 = vunpack.c.l.b16 %v40
  %v154 = vunpack.c.h.b16 %v40
  %v155 = vunpack.c.l.b16 %v41
  %v156 = vunpack.c.h.b16 %v41
  %v157 = vunpack.c.l.b16 %v42
  %v158 = vunpack.c.h.b16 %v42
  %v159 = vunpack.c.l.b16 %v43
  %v160 = vunpack.c.h.b16 %v43
  %v161 = vunpack.c.l.b16 %v44
  %v162 = vunpack.c.h.b16 %v44
  %v163 = vunpack.c.l.b16 %v45
  %v164 = vunpack.c.h.b16 %v45
  %v165 = vunpack.c.l.b16 %v46
  %v166 = vunpack.c.h.b16 %v46
  %v167 = vunpack.c.l.b16 %v47
  %v168 = vunpack.c.h.b16 %v47
  %v169 = vunpack.c.l.b16 %v48
  %v170 = vunpack.c.h.b16 %v48
  %v171 = vpack.c.b16 %v105, %v103
  %v172 = vpack.c.b16 %v106, %v104
  %v173 = vpack.c.b16 %v109, %v107
  %v174 = vpack.c.b16 %v110, %v108
  %v175 = vpack.c.b16 %v113, %v111
  %v176 = vpack.c.b16 %v114, %v112
  %v177 = vpack.c.b16 %v117, %v115
  %v178 = vpack.c.b16 %v118, %v116
  %v179 = vpack.c.b16 %v121, %v119
  %v180 = vpack.c.b16 %v122, %v120
  %v181 = vpack.c.b16 %v125, %v123
  %v182 = vpack.c.b16 %v126, %v124
  %v183 = vpack.c.b16 %v129, %v127
  %v184 = vpack.c.b16 %v130, %v128
  %v185 = vpack.c.b16 %v133, %v131
  %v186 = vpack.c.b16 %v134, %v132
  %v187 = vpack.c.b16 %v137, %v135
  %v188 = vpack.c.b16 %v138, %v136
  %v189 = vpack.c.b16 %v141, %v139
  %v190 = vpack.c.b16 %v142, %v140
  %v191 = vpack.c.b16 %v145, %v143
  %v192 = vpack.c.b16 %v146, %v144
  %v193 = vpack.c.b16 %v149, %v147
  %v194 = vpack.c.b16 %v150, %v148
  %v195 = vpack.c.b16 %v153, %v151
  %v196 = vpack.c.b16 %v154, %v152
  %v197 = vpack.c.b16 %v157, %v155
  %v198 = vpack.c.b16 %v158, %v156
  %v199 = vpack.c.b16 %v161, %v159
  %v200 = vpack.c.b16 %v162, %v160
  %v201 = vpack.c.b16 %v165, %v163
  %v202 = vpack.c.b16 %v166, %v164
  %v203 = vpack.c.b16 %v169, %v167
  %v204 = vpack.c.b16 %v170, %v168
  %v242 = vunpack.c.l.b16 %v49
  %v243 = vunpack.c.l.b16 %v50
  %v244 = vunpack.c.l.b16 %v51
  %v245 = vunpack.c.l.b16 %v52
  %v246 = vunpack.c.l.b16 %v53
  %v247 = vunpack.c.l.b16 %v54
  %v248 = vunpack.c.l.b16 %v55
  %v249 = vunpack.c.l.b16 %v56
  %v250 = vunpack.c.l.b16 %v57
  %v251 = vunpack.c.l.b16 %v58
  %v252 = vunpack.c.l.b16 %v59
  %v253 = vunpack.c.l.b16 %v60
  %v254 = vunpack.c.l.b16 %v61
  %v255 = vunpack.c.l.b16 %v62
  %v256 = vunpack.c.l.b16 %v63
  %v257 = vunpack.c.l.b16 %v64
  %v258 = vunpack.c.l.b16 %v65
  %v259 = vunpack.c.l.b16 %v66
  %v260 = vunpack.c.l.b16 %v67
  %v261 = vunpack.c.l.b16 %v68
  %v262 = vpack.c.b16 %v243, %v242
  %v263 = vpack.c.b16 %v245, %v244
  %v264 = vpack.c.b16 %v247, %v246
  %v265 = vpack.c.b16 %v249, %v248
  %v266 = vpack.c.b16 %v251, %v250
  %v267 = vpack.c.b16 %v253, %v252
  %v268 = vpack.c.b16 %v255, %v254
  %v269 = vpack.c.b16 %v257, %v256
  %v270 = vpack.c.b16 %v259, %v258
  %v271 = vpack.c.b16 %v261, %v260
  %vm282 = vcmask 261120
  %v284 = vsel %vm282, %v172, 0
  %v287 = vsel %vm282, %v174, 0
  %v290 = vsel %vm282, %v176, 0
  %v293 = vsel %vm282, %v178, 0
  %v296 = vsel %vm282, %v180, 0
  %v299 = vsel %vm282, %v182, 0
  %v302 = vsel %vm282, %v184, 0
  %v305 = vsel %vm282, %v186, 0
  %v308 = vsel %vm282, %v188, 0
  %v311 = vsel %vm282, %v190, 0
  %v314 = vsel %vm282, %v192, 0
  %v317 = vsel %vm282, %v194, 0
  %v320 = vsel %vm282, %v196, 0
  %v323 = vsel %vm282, %v198, 0
  %v326 = vsel %vm282, %v200, 0
  %v329 = vsel %vm282, %v202, 0
  %v332 = vsel %vm282, %v204, 0
  %334 = vmatprep.subr.bf16.mxu0 0
  %335 = vmatpush1.bf16.msra.mxu0 %v262
  %336 = vmatprep.subr.bf16.mxu0 0
  %337 = vmatpush1.bf16.msra.mxu0 %v263
  %338 = vmatprep.subr.bf16.mxu0 0
  %339 = vmatpush1.bf16.msra.mxu0 %v264
  %340 = vmatprep.subr.bf16.mxu0 0
  %341 = vmatpush1.bf16.msra.mxu0 %v265
  %342 = vmatprep.subr.bf16.mxu0 0
  %343 = vmatpush1.bf16.msra.mxu0 %v266
  %344 = vmatprep.subr.bf16.mxu0 0
  %345 = vmatpush1.bf16.msra.mxu0 %v267
  %346 = vmatprep.subr.bf16.mxu0 0
  %347 = vmatpush1.bf16.msra.mxu0 %v268
  %348 = vmatprep.subr.bf16.mxu0 0
  %349 = vmatpush1.bf16.msra.mxu0 %v269
  %350 = vmatprep.subr.bf16.mxu0 0
  %351 = vmatpush1.bf16.msra.mxu0 %v270
  %352 = vmatprep.subr.bf16.mxu0 0
  %353 = vmatpush1.bf16.msra.mxu0 %v271
  %354 = vmatprep.subr.bf16.mxu0 0
  %355 = vmatpush1.bf16.msra.mxu0 0
  %356 = vmatprep.subr.bf16.mxu0 0
  %357 = vmatpush1.bf16.msra.mxu0 0
  %358 = vmatprep.subr.bf16.mxu0 0
  %359 = vmatpush1.bf16.msra.mxu0 0
  %360 = vmatprep.subr.bf16.mxu0 0
  %361 = vmatpush1.bf16.msra.mxu0 0
  %362 = vmatprep.subr.bf16.mxu0 0
  %363 = vmatpush1.bf16.msra.mxu0 0
  %364 = vmatprep.subr.bf16.mxu0 0
  %365 = vmatpush1.bf16.msra.mxu0 0
  %366 = vmatprep.mubr.bf16.mxu0 %v284
  %367 = vmatmul.mubr.bf16.gmra.mrb[0].mxu0 %v171
  %v368 = vpop.f32.mrb[0].mxu0
  %v369 = vadd.f32 0.0, %v368
  %v370 = vpop.f32.mrb[0].mxu0
  %v371 = vpop.f32.mrb[0].mxu0
  %v372 = vadd.f32 0.0, %v371
  %v373 = vpop.f32.mrb[0].mxu0
  %374 = vmatprep.mubr.bf16.mxu0 %v287
  %375 = vmatmul.mubr.bf16.gmra.mrb[0].mxu0 %v173
  %v376 = vpop.f32.mrb[0].mxu0
  %v377 = vadd.f32 0.0, %v376
  %v378 = vpop.f32.mrb[0].mxu0
  %v379 = vpop.f32.mrb[0].mxu0
  %v380 = vadd.f32 0.0, %v379
  %v381 = vpop.f32.mrb[0].mxu0
  %382 = vmatprep.mubr.bf16.mxu0 %v290
  %383 = vmatmul.mubr.bf16.gmra.mrb[0].mxu0 %v175
  %v384 = vpop.f32.mrb[0].mxu0
  %v385 = vadd.f32 0.0, %v384
  %v386 = vpop.f32.mrb[0].mxu0
  %v387 = vpop.f32.mrb[0].mxu0
  %v388 = vadd.f32 0.0, %v387
  %v389 = vpop.f32.mrb[0].mxu0
  %390 = vmatprep.mubr.bf16.mxu0 %v293
  %391 = vmatmul.mubr.bf16.gmra.mrb[0].mxu0 %v177
  %v392 = vpop.f32.mrb[0].mxu0
  %v393 = vadd.f32 0.0, %v392
  %v394 = vpop.f32.mrb[0].mxu0
  %v395 = vpop.f32.mrb[0].mxu0
  %v396 = vadd.f32 0.0, %v395
  %v397 = vpop.f32.mrb[0].mxu0
  %398 = vmatprep.mubr.bf16.mxu0 %v296
  %399 = vmatmul.mubr.bf16.gmra.mrb[0].mxu0 %v179
  %v400 = vpop.f32.mrb[0].mxu0
  %v401 = vadd.f32 0.0, %v400
  %v402 = vpop.f32.mrb[0].mxu0
  %v403 = vpop.f32.mrb[0].mxu0
  %v404 = vadd.f32 0.0, %v403
  %v405 = vpop.f32.mrb[0].mxu0
  %406 = vmatprep.mubr.bf16.mxu0 %v299
  %407 = vmatmul.mubr.bf16.gmra.mrb[0].mxu0 %v181
  %v408 = vpop.f32.mrb[0].mxu0
  %v409 = vadd.f32 0.0, %v408
  %v410 = vpop.f32.mrb[0].mxu0
  %v411 = vpop.f32.mrb[0].mxu0
  %v412 = vadd.f32 0.0, %v411
  %v413 = vpop.f32.mrb[0].mxu0
  %414 = vmatprep.mubr.bf16.mxu0 %v302
  %415 = vmatmul.mubr.bf16.gmra.mrb[0].mxu0 %v183
  %v416 = vpop.f32.mrb[0].mxu0
  %v417 = vadd.f32 0.0, %v416
  %v418 = vpop.f32.mrb[0].mxu0
  %v419 = vpop.f32.mrb[0].mxu0
  %v420 = vadd.f32 0.0, %v419
  %v421 = vpop.f32.mrb[0].mxu0
  %422 = vmatprep.mubr.bf16.mxu0 %v305
  %423 = vmatmul.mubr.bf16.gmra.mrb[0].mxu0 %v185
  %v424 = vpop.f32.mrb[0].mxu0
  %v425 = vadd.f32 0.0, %v424
  %v426 = vpop.f32.mrb[0].mxu0
  %v427 = vpop.f32.mrb[0].mxu0
  %v428 = vadd.f32 0.0, %v427
  %v429 = vpop.f32.mrb[0].mxu0
  %430 = vmatprep.mubr.bf16.mxu0 %v308
  %431 = vmatmul.mubr.bf16.gmra.mrb[0].mxu0 %v187
  %v432 = vpop.f32.mrb[0].mxu0
  %v433 = vadd.f32 0.0, %v432
  %v434 = vpop.f32.mrb[0].mxu0
  %v435 = vpop.f32.mrb[0].mxu0
  %v436 = vadd.f32 0.0, %v435
  %v437 = vpop.f32.mrb[0].mxu0
  %438 = vmatprep.mubr.bf16.mxu0 %v311
  %439 = vmatmul.mubr.bf16.gmra.mrb[0].mxu0 %v189
  %v440 = vpop.f32.mrb[0].mxu0
  %v441 = vadd.f32 0.0, %v440
  %v442 = vpop.f32.mrb[0].mxu0
  %v443 = vpop.f32.mrb[0].mxu0
  %v444 = vadd.f32 0.0, %v443
  %v445 = vpop.f32.mrb[0].mxu0
  %446 = vmatprep.mubr.bf16.mxu0 %v314
  %447 = vmatmul.mubr.bf16.gmra.mrb[0].mxu0 %v191
  %v448 = vpop.f32.mrb[0].mxu0
  %v449 = vadd.f32 0.0, %v448
  %v450 = vpop.f32.mrb[0].mxu0
  %v451 = vpop.f32.mrb[0].mxu0
  %v452 = vadd.f32 0.0, %v451
  %v453 = vpop.f32.mrb[0].mxu0
  %454 = vmatprep.mubr.bf16.mxu0 %v317
  %455 = vmatmul.mubr.bf16.gmra.mrb[0].mxu0 %v193
  %v456 = vpop.f32.mrb[0].mxu0
  %v457 = vadd.f32 0.0, %v456
  %v458 = vpop.f32.mrb[0].mxu0
  %v459 = vpop.f32.mrb[0].mxu0
  %v460 = vadd.f32 0.0, %v459
  %v461 = vpop.f32.mrb[0].mxu0
  %462 = vmatprep.mubr.bf16.mxu0 %v320
  %463 = vmatmul.mubr.bf16.gmra.mrb[0].mxu0 %v195
  %v464 = vpop.f32.mrb[0].mxu0
  %v465 = vadd.f32 0.0, %v464
  %v466 = vpop.f32.mrb[0].mxu0
  %v467 = vpop.f32.mrb[0].mxu0
  %v468 = vadd.f32 0.0, %v467
  %v469 = vpop.f32.mrb[0].mxu0
  %470 = vmatprep.mubr.bf16.mxu0 %v323
  %471 = vmatmul.mubr.bf16.gmra.mrb[0].mxu0 %v197
  %v472 = vpop.f32.mrb[0].mxu0
  %v473 = vadd.f32 0.0, %v472
  %v474 = vpop.f32.mrb[0].mxu0
  %v475 = vpop.f32.mrb[0].mxu0
  %v476 = vadd.f32 0.0, %v475
  %v477 = vpop.f32.mrb[0].mxu0
  %478 = vmatprep.mubr.bf16.mxu0 %v326
  %479 = vmatmul.mubr.bf16.gmra.mrb[0].mxu0 %v199
  %v480 = vpop.f32.mrb[0].mxu0
  %v481 = vadd.f32 0.0, %v480
  %v482 = vpop.f32.mrb[0].mxu0
  %v483 = vpop.f32.mrb[0].mxu0
  %v484 = vadd.f32 0.0, %v483
  %v485 = vpop.f32.mrb[0].mxu0
  %486 = vmatprep.mubr.bf16.mxu0 %v329
  %487 = vmatmul.mubr.bf16.gmra.mrb[0].mxu0 %v201
  %v488 = vpop.f32.mrb[0].mxu0
  %v489 = vadd.f32 0.0, %v488
  %v490 = vpop.f32.mrb[0].mxu0
  %v491 = vpop.f32.mrb[0].mxu0
  %v492 = vadd.f32 0.0, %v491
  %v493 = vpop.f32.mrb[0].mxu0
  %494 = vmatprep.mubr.bf16.mxu0 %v332
  %495 = vmatmul.mubr.bf16.gmra.mrb[0].mxu0 %v203
  %v496 = vpop.f32.mrb[0].mxu0
  %v497 = vadd.f32 0.0, %v496
  %v498 = vpop.f32.mrb[0].mxu0
  %v499 = vpop.f32.mrb[0].mxu0
  %v500 = vadd.f32 0.0, %v499
  %v501 = vpop.f32.mrb[0].mxu0
  %502 = vdwg.mxu0
  %v503 = vmax.f32 %v369, %v377
  %v504 = vmax.f32 %v372, %v380
  %v505 = vmax.f32 %v503, %v385
  %v506 = vmax.f32 %v504, %v388
  %v507 = vmax.f32 %v505, %v393
  %v508 = vmax.f32 %v506, %v396
  %v509 = vmax.f32 %v507, %v401
  %v510 = vmax.f32 %v508, %v404
  %v511 = vmax.f32 %v509, %v409
  %v512 = vmax.f32 %v510, %v412
  %v513 = vmax.f32 %v511, %v417
  %v514 = vmax.f32 %v512, %v420
  %v515 = vmax.f32 %v513, %v425
  %v516 = vmax.f32 %v514, %v428
  %v517 = vmax.f32 %v515, %v433
  %v518 = vmax.f32 %v516, %v436
  %v519 = vmax.f32 %v517, %v441
  %v520 = vmax.f32 %v518, %v444
  %v521 = vmax.f32 %v519, %v449
  %v522 = vmax.f32 %v520, %v452
  %v523 = vmax.f32 %v521, %v457
  %v524 = vmax.f32 %v522, %v460
  %v525 = vmax.f32 %v523, %v465
  %v526 = vmax.f32 %v524, %v468
  %v527 = vmax.f32 %v525, %v473
  %v528 = vmax.f32 %v526, %v476
  %v529 = vmax.f32 %v527, %v481
  %v530 = vmax.f32 %v528, %v484
  %v531 = vmax.f32 %v529, %v489
  %v532 = vmax.f32 %v530, %v492
  %v533 = vmax.f32 %v531, %v497
  %v534 = vmax.f32 %v532, %v500
  %v535 = vld [vmem:[%s2] sm:$0x1]
  %v537 = vlaneseq
  %v538 = vshrl.u32 %v537, 7
  %v539 = vsub.s32 0, %v538
  %v540 = vrot.slane %v535, %v539
  %v542 = vadd.f32 %v533, %v540
  %v543 = vadd.f32 %v534, %v540
  %v544 = vmax.f32 %v542, 0.0
  %v545 = vmax.f32 %v543, 0.0
  %546 = vst [vmem:[%s3] sm:$0xff] %v544
  %547 = vst [vmem:[%s3 + $0x8] sm:$0xff] %v545
  // Predicated region
  $region14: #{cnn_forward.1} parent=0 // pred_check
    _
  $region15: #{cnn_forward.1} parent=0 // pred_check_branch
    %549 = sbr.rel (0) target = $region17
  $region16: #{cnn_forward.1} parent=0 // pred_region
    _
  $region17: #{cnn_forward.1} parent=0 // pred_fallthru
    _
  // Predicated region
  $region18: #{cnn_forward.1} parent=0 // pred_check
    _
  $region19: #{cnn_forward.1} parent=0 // pred_check_branch
    %551 = sbr.rel (0) target = $region21
  $region20: #{cnn_forward.1} parent=0 // pred_region
    _
  $region21: #{cnn_forward.1} parent=0 // pred_fallthru
    _

</llo_original>
